<compile_context>
chip_gen: v5e
topology: v5e:2x2
jax: 0.10.0
libtpu: 0.0.40
codegen_flags: <defaults>
</compile_context>

<pallas_src>
import functools

import jax
import jax.numpy as jnp
from jax.experimental import pallas as pl
from jax.experimental.pallas import tpu as pltpu


def _support_kernel(feat_ref, w_ref, out_ref):
    # support = feature_tile @ W  (full weight each step, row-tiled feature)
    out_ref[...] = jnp.dot(
        feat_ref[...], w_ref[...], preferred_element_type=jnp.float32
    ).astype(out_ref.dtype)


def _aggregate_kernel(adj_ref, sup_ref, bias_ref, out_ref):
    # out_tile = adj_tile @ support + bias
    out = jnp.dot(adj_ref[...], sup_ref[...], preferred_element_type=jnp.float32)
    out_ref[...] = (out + bias_ref[...]).astype(out_ref.dtype)


@functools.partial(jax.jit, static_argnames=("row_tile", "stream_bf16"))
def graph_convolution(feature, adj, weight, bias=None, *, row_tile=128,
                      stream_bf16=False):
    """Pallas GCN layer: adj @ (feature @ weight) + bias."""
    n, f_in = feature.shape
    f_out = weight.shape[1]
    assert adj.shape == (n, n)
    assert weight.shape == (f_in, f_out)

    row_tile = min(row_tile, n)
    assert n % row_tile == 0, "row_tile must divide number of nodes"

    # Lane-dense output width: pad F_out up to a multiple of 128.
    f_out_pad = pl.cdiv(f_out, 128) * 128
    pad_cols = f_out_pad - f_out

    w_pad = jnp.pad(weight.astype(jnp.float32), ((0, 0), (0, pad_cols)))
    if bias is None:
        bias_pad = jnp.zeros((1, f_out_pad), jnp.float32)
    else:
        bias_pad = jnp.pad(
            bias.reshape(1, f_out).astype(jnp.float32), ((0, 0), (0, pad_cols))
        )

    # Optional bf16 streaming for the bandwidth-bound aggregation matmul
    # (f32 accumulation is kept via preferred_element_type).
    stream_dtype = jnp.bfloat16 if stream_bf16 else jnp.float32
    adj_s = adj.astype(stream_dtype)

    grid = (n // row_tile,)
    parallel = pltpu.CompilerParams(dimension_semantics=("parallel",))

    # ---- kernel 1: support = feature @ W (hoisted, row-parallel) ----
    support = pl.pallas_call(
        _support_kernel,
        out_shape=jax.ShapeDtypeStruct((n, f_out_pad), stream_dtype),
        grid_spec=pltpu.PrefetchScalarGridSpec(
            num_scalar_prefetch=0,
            grid=grid,
            in_specs=[
                pl.BlockSpec((row_tile, f_in), lambda i: (i, 0)),
                pl.BlockSpec((f_in, f_out_pad), lambda i: (0, 0)),
            ],
            out_specs=pl.BlockSpec((row_tile, f_out_pad), lambda i: (i, 0)),
        ),
        compiler_params=parallel,
    )(feature.astype(jnp.float32), w_pad)

    # ---- kernel 2: out = adj @ support + bias (row-parallel) ----
    out_pad = pl.pallas_call(
        _aggregate_kernel,
        out_shape=jax.ShapeDtypeStruct((n, f_out_pad), jnp.float32),
        grid_spec=pltpu.PrefetchScalarGridSpec(
            num_scalar_prefetch=0,
            grid=grid,
            in_specs=[
                pl.BlockSpec((row_tile, n), lambda i: (i, 0)),       # adj row strip
                pl.BlockSpec((n, f_out_pad), lambda i: (0, 0)),      # full support
                pl.BlockSpec((1, f_out_pad), lambda i: (0, 0)),      # bias row
            ],
            out_specs=pl.BlockSpec((row_tile, f_out_pad), lambda i: (i, 0)),
        ),
        compiler_params=parallel,
    )(adj_s, support, bias_pad)

    return out_pad[:, :f_out]


def reference(feature, adj, weight, bias):
    out = adj @ (feature @ weight)
    if bias is not None:
        out = out + bias
    return out


if __name__ == "__main__":
    # Small, deterministic example consistent with the module:
    #   in_features=32, out_features=64, N=128 graph nodes.
    N, F_IN, F_OUT = 128, 32, 64

    key = jax.random.PRNGKey(0)
    k_feat, k_adj, k_w, k_b = jax.random.split(key, 4)

    feature = jax.random.normal(k_feat, (N, F_IN), dtype=jnp.float32)

    # Symmetric row-normalized adjacency (typical GCN input), dense here.
    # TODO(synk): torch.spmm sparse-CSR path has no dense-Pallas equivalent;
    # adjacency is treated as dense (same numerics).
    a = jax.random.uniform(k_adj, (N, N), dtype=jnp.float32)
    a = (a > 0.9).astype(jnp.float32)
    a = a + a.T + jnp.eye(N, dtype=jnp.float32)
    adj = a / jnp.sum(a, axis=1, keepdims=True)

    # reset_parameters(): uniform(-stdv, stdv), stdv = 1/sqrt(out_features)
    stdv = 1.0 / (F_OUT ** 0.5)
    weight = jax.random.uniform(
        k_w, (F_IN, F_OUT), minval=-stdv, maxval=stdv, dtype=jnp.float32
    )
    bias = jax.random.uniform(
        k_b, (F_OUT,), minval=-stdv, maxval=stdv, dtype=jnp.float32
    )

    out = graph_convolution(feature, adj, weight, bias)
    out = jax.block_until_ready(out)

    ref = reference(feature, adj, weight, bias)
    assert out.shape == (N, F_OUT)
    assert jnp.allclose(out, ref, atol=1e-4, rtol=1e-4), "mismatch vs reference"

    print("KERNEL_OK")
</pallas_src>

<mosaic_0001>
module attributes {stable_mosaic.version = 11 : i64} {
  func.func @_support_kernel(%arg0: i32, %arg1: memref<128x32xf32, #tpu.memory_space<vmem>>, %arg2: memref<32x128xf32, #tpu.memory_space<vmem>>, %arg3: memref<128x128xf32, #tpu.memory_space<vmem>>) attributes {dimension_semantics = [#tpu.dimension_semantics<parallel>], iteration_bounds = array<i64: 1>, scalar_prefetch = 0 : i64, scratch_operands = 0 : i64, tpu.core_type = #tpu.core_type<tc>, window_params = [{transform_indices = @transform_0, window_bounds = array<i64: 128, 32>}, {pipeline_mode = #tpu.pipeline_mode<synchronous>, transform_indices = @transform_1, window_bounds = array<i64: 32, 128>}, {transform_indices = @transform_2, window_bounds = array<i64: 128, 128>}]} {
    %c0 = arith.constant 0 : index
    %c0_0 = arith.constant 0 : index
    %0 = vector.load %arg1[%c0, %c0_0] : memref<128x32xf32, #tpu.memory_space<vmem>>, vector<128x32xf32>
    %c0_1 = arith.constant 0 : index
    %c0_2 = arith.constant 0 : index
    %1 = vector.load %arg2[%c0_1, %c0_2] : memref<32x128xf32, #tpu.memory_space<vmem>>, vector<32x128xf32>
    %cst = arith.constant dense<0.000000e+00> : vector<128x128xf32>
    %2 = tpu.matmul %0, %1, %cst {dimension_numbers = #tpu.dot_dimension_numbers<[1], [0], [0], [1], [0, 0, 1, 1], [], []>} : vector<128x32xf32>, vector<32x128xf32>, vector<128x128xf32> -> vector<128x128xf32>
    %c0_3 = arith.constant 0 : index
    %c0_4 = arith.constant 0 : index
    %3 = vector.load %arg3[%c0_3, %c0_4] : memref<128x128xf32, #tpu.memory_space<vmem>>, vector<128x128xf32>
    tpu.vector_store %arg3[%c0_3, %c0_4], %2 {strides = array<i32>} : memref<128x128xf32, #tpu.memory_space<vmem>>, vector<128x128xf32>,
    return
  }
  func.func @transform_0(%arg0: i32) -> (i32, i32) {
    %c0_i32 = arith.constant 0 : i32
    %c0_i32_0 = arith.constant 0 : i32
    return %arg0, %c0_i32 : i32, i32
  }
  func.func @transform_1(%arg0: i32) -> (i32, i32) {
    %c0_i32 = arith.constant 0 : i32
    %c0_i32_0 = arith.constant 0 : i32
    %c0_i32_1 = arith.constant 0 : i32
    return %c0_i32, %c0_i32_0 : i32, i32
  }
  func.func @transform_2(%arg0: i32) -> (i32, i32) {
    %c0_i32 = arith.constant 0 : i32
    %c0_i32_0 = arith.constant 0 : i32
    return %arg0, %c0_i32 : i32, i32
  }
}

module attributes {stable_mosaic.version = 11 : i64} {
  func.func @_aggregate_kernel(%arg0: i32, %arg1: memref<128x128xf32, #tpu.memory_space<vmem>>, %arg2: memref<128x128xf32, #tpu.memory_space<vmem>>, %arg3: memref<1x128xf32, #tpu.memory_space<vmem>>, %arg4: memref<128x128xf32, #tpu.memory_space<vmem>>) attributes {dimension_semantics = [#tpu.dimension_semantics<parallel>], iteration_bounds = array<i64: 1>, scalar_prefetch = 0 : i64, scratch_operands = 0 : i64, tpu.core_type = #tpu.core_type<tc>, window_params = [{transform_indices = @transform_0, window_bounds = array<i64: 128, 128>}, {pipeline_mode = #tpu.pipeline_mode<synchronous>, transform_indices = @transform_1, window_bounds = array<i64: 128, 128>}, {pipeline_mode = #tpu.pipeline_mode<synchronous>, transform_indices = @transform_2, window_bounds = array<i64: 1, 128>}, {transform_indices = @transform_3, window_bounds = array<i64: 128, 128>}]} {
    %c0 = arith.constant 0 : index
    %c0_0 = arith.constant 0 : index
    %0 = vector.load %arg1[%c0, %c0_0] : memref<128x128xf32, #tpu.memory_space<vmem>>, vector<128x128xf32>
    %c0_1 = arith.constant 0 : index
    %c0_2 = arith.constant 0 : index
    %1 = vector.load %arg2[%c0_1, %c0_2] : memref<128x128xf32, #tpu.memory_space<vmem>>, vector<128x128xf32>
    %cst = arith.constant dense<0.000000e+00> : vector<128x128xf32>
    %2 = tpu.matmul %0, %1, %cst {dimension_numbers = #tpu.dot_dimension_numbers<[1], [0], [0], [1], [0, 0, 1, 1], [], []>} : vector<128x128xf32>, vector<128x128xf32>, vector<128x128xf32> -> vector<128x128xf32>
    %c0_3 = arith.constant 0 : index
    %c0_4 = arith.constant 0 : index
    %3 = vector.load %arg3[%c0_3, %c0_4] : memref<1x128xf32, #tpu.memory_space<vmem>>, vector<1x128xf32>
    %4 = vector.broadcast %3 : vector<1x128xf32> to vector<128x128xf32>
    %5 = arith.addf %2, %4 : vector<128x128xf32>
    %c0_5 = arith.constant 0 : index
    %c0_6 = arith.constant 0 : index
    %6 = vector.load %arg4[%c0_5, %c0_6] : memref<128x128xf32, #tpu.memory_space<vmem>>, vector<128x128xf32>
    tpu.vector_store %arg4[%c0_5, %c0_6], %5 {strides = array<i32>} : memref<128x128xf32, #tpu.memory_space<vmem>>, vector<128x128xf32>,
    return
  }
  func.func @transform_0(%arg0: i32) -> (i32, i32) {
    %c0_i32 = arith.constant 0 : i32
    %c0_i32_0 = arith.constant 0 : i32
    return %arg0, %c0_i32 : i32, i32
  }
  func.func @transform_1(%arg0: i32) -> (i32, i32) {
    %c0_i32 = arith.constant 0 : i32
    %c0_i32_0 = arith.constant 0 : i32
    %c0_i32_1 = arith.constant 0 : i32
    return %c0_i32, %c0_i32_0 : i32, i32
  }
  func.func @transform_2(%arg0: i32) -> (i32, i32) {
    %c0_i32 = arith.constant 0 : i32
    %c0_i32_0 = arith.constant 0 : i32
    %c0_i32_1 = arith.constant 0 : i32
    return %c0_i32, %c0_i32_0 : i32, i32
  }
  func.func @transform_3(%arg0: i32) -> (i32, i32) {
    %c0_i32 = arith.constant 0 : i32
    %c0_i32_0 = arith.constant 0 : i32
    return %arg0, %c0_i32 : i32, i32
  }
}

</mosaic_0001>

<llo_original>
// kernel: graph_convolution.3
$region0: #{graph_convolution.3}
  #allocation0 [shape = 'u32[]', space=smem, size = 0x4, offset = 0x4, fixed_abs, tag = 'smem constant byte address 0x4 - core index']
  #allocation1 [shape = 'u32[72,128]{1,0:T(1,128)}', space=vmem, size = 0x9000, scoped, tag = 'internal scratch']
  %s0 = inlined_call_operand.vmem [shape: f32[128,128], index: 0, kind: input, shape index: {}]
  %s1 = inlined_call_operand.vmem [shape: f32[128,128], index: 1, kind: input, shape index: {}]
  %s2 = inlined_call_operand.vmem [shape: f32[1,128], index: 2, kind: input, shape index: {}]
  %s3 = inlined_call_operand.vmem [shape: f32[128,128], index: 3, kind: output, shape index: {}]
  %s4 = sld [smem:[#allocation0]]
  $region22: #{graph_convolution.3} parent=0
    _
  %s6 = ssub.s32 1, %s4
  %s7 = scalar_select 0, %s6, %s4
  // Predicated region
  $region2: #{graph_convolution.3} parent=0 // pred_check
    _
  $region3: #{graph_convolution.3} parent=0 // pred_check_branch
    %9 = sbr.rel (0) target = $region5
  $region4: #{graph_convolution.3} parent=0 // pred_region
    _
  $region5: #{graph_convolution.3} parent=0 // pred_fallthru
    _
  // Predicated region
  $region6: #{graph_convolution.3} parent=0 // pred_check
    _
  $region7: #{graph_convolution.3} parent=0 // pred_check_branch
    %11 = sbr.rel (0) target = $region9
  $region8: #{graph_convolution.3} parent=0 // pred_region
    _
  $region9: #{graph_convolution.3} parent=0 // pred_fallthru
    _
  // Predicated region
  $region10: #{graph_convolution.3} parent=0 // pred_check
    _
  $region11: #{graph_convolution.3} parent=0 // pred_check_branch
    %13 = sbr.rel (0) target = $region13
  $region12: #{graph_convolution.3} parent=0 // pred_region
    _
  $region13: #{graph_convolution.3} parent=0 // pred_fallthru
    _
  %v14 = vld [vmem:[%s0] sm:$0xff]
  %v15 = vld [vmem:[%s0 + $0x8] sm:$0xff]
  %v16 = vld [vmem:[%s0 + $0x10] sm:$0xff]
  %v17 = vld [vmem:[%s0 + $0x18] sm:$0xff]
  %v18 = vld [vmem:[%s0 + $0x20] sm:$0xff]
  %v19 = vld [vmem:[%s0 + $0x28] sm:$0xff]
  %v20 = vld [vmem:[%s0 + $0x30] sm:$0xff]
  %v21 = vld [vmem:[%s0 + $0x38] sm:$0xff]
  %v22 = vld [vmem:[%s0 + $0x40] sm:$0xff]
  %v23 = vld [vmem:[%s0 + $0x48] sm:$0xff]
  %v24 = vld [vmem:[%s0 + $0x50] sm:$0xff]
  %v25 = vld [vmem:[%s0 + $0x58] sm:$0xff]
  %v26 = vld [vmem:[%s0 + $0x60] sm:$0xff]
  %v27 = vld [vmem:[%s0 + $0x68] sm:$0xff]
  %v28 = vld [vmem:[%s0 + $0x70] sm:$0xff]
  %v29 = vld [vmem:[%s0 + $0x78] sm:$0xff]
  %v30 = vld [vmem:[%s1] sm:$0xff]
  %v31 = vld [vmem:[%s1 + $0x8] sm:$0xff]
  %v32 = vld [vmem:[%s1 + $0x10] sm:$0xff]
  %v33 = vld [vmem:[%s1 + $0x18] sm:$0xff]
  %v34 = vld [vmem:[%s1 + $0x20] sm:$0xff]
  %v35 = vld [vmem:[%s1 + $0x28] sm:$0xff]
  %v36 = vld [vmem:[%s1 + $0x30] sm:$0xff]
  %v37 = vld [vmem:[%s1 + $0x38] sm:$0xff]
  %v38 = vld [vmem:[%s1 + $0x40] sm:$0xff]
  %v39 = vld [vmem:[%s1 + $0x48] sm:$0xff]
  %v40 = vld [vmem:[%s1 + $0x50] sm:$0xff]
  %v41 = vld [vmem:[%s1 + $0x58] sm:$0xff]
  %v42 = vld [vmem:[%s1 + $0x60] sm:$0xff]
  %v43 = vld [vmem:[%s1 + $0x68] sm:$0xff]
  %v44 = vld [vmem:[%s1 + $0x70] sm:$0xff]
  %v45 = vld [vmem:[%s1 + $0x78] sm:$0xff]
  %v46 = vld [vmem:[%s2] sm:$0x1]
  %v48 = vperm.slane %v46, 0
  %50 = vmatpush.msra.mxu0 %v45
  %51 = vmatpush.msra.mxu0 %v44
  %52 = vmatpush.msra.mxu0 %v43
  %53 = vmatpush.msra.mxu0 %v42
  %54 = vmatpush.msra.mxu0 %v41
  %55 = vmatpush.msra.mxu0 %v40
  %56 = vmatpush.msra.mxu0 %v39
  %57 = vmatpush.msra.mxu0 %v38
  %58 = vmatpush.msra.mxu0 %v37
  %59 = vmatpush.msra.mxu0 %v36
  %60 = vmatpush.msra.mxu0 %v35
  %61 = vmatpush.msra.mxu0 %v34
  %62 = vmatpush.msra.mxu0 %v33
  %63 = vmatpush.msra.mxu0 %v32
  %64 = vmatpush.msra.mxu0 %v31
  %65 = vmatpush.msra.mxu0 %v30
  %66 = vmatmul.f32.gmra.mxu0 %v14
  %v67 = vpop.f32.mrf.mxu0
  %v68 = vadd.f32 %v48, %v67
  %69 = vmatmul.f32.gmra.mxu0 %v15
  %v70 = vpop.f32.mrf.mxu0
  %v71 = vadd.f32 %v48, %v70
  %72 = vmatmul.f32.gmra.mxu0 %v16
  %v73 = vpop.f32.mrf.mxu0
  %v74 = vadd.f32 %v48, %v73
  %75 = vmatmul.f32.gmra.mxu0 %v17
  %v76 = vpop.f32.mrf.mxu0
  %v77 = vadd.f32 %v48, %v76
  %78 = vmatmul.f32.gmra.mxu0 %v18
  %v79 = vpop.f32.mrf.mxu0
  %v80 = vadd.f32 %v48, %v79
  %81 = vmatmul.f32.gmra.mxu0 %v19
  %v82 = vpop.f32.mrf.mxu0
  %v83 = vadd.f32 %v48, %v82
  %84 = vmatmul.f32.gmra.mxu0 %v20
  %v85 = vpop.f32.mrf.mxu0
  %v86 = vadd.f32 %v48, %v85
  %87 = vmatmul.f32.gmra.mxu0 %v21
  %v88 = vpop.f32.mrf.mxu0
  %v89 = vadd.f32 %v48, %v88
  %90 = vmatmul.f32.gmra.mxu0 %v22
  %v91 = vpop.f32.mrf.mxu0
  %v92 = vadd.f32 %v48, %v91
  %93 = vmatmul.f32.gmra.mxu0 %v23
  %v94 = vpop.f32.mrf.mxu0
  %v95 = vadd.f32 %v48, %v94
  %96 = vmatmul.f32.gmra.mxu0 %v24
  %v97 = vpop.f32.mrf.mxu0
  %v98 = vadd.f32 %v48, %v97
  %99 = vmatmul.f32.gmra.mxu0 %v25
  %v100 = vpop.f32.mrf.mxu0
  %v101 = vadd.f32 %v48, %v100
  %102 = vmatmul.f32.gmra.mxu0 %v26
  %v103 = vpop.f32.mrf.mxu0
  %v104 = vadd.f32 %v48, %v103
  %105 = vmatmul.f32.gmra.mxu0 %v27
  %v106 = vpop.f32.mrf.mxu0
  %v107 = vadd.f32 %v48, %v106
  %108 = vmatmul.f32.gmra.mxu0 %v28
  %v109 = vpop.f32.mrf.mxu0
  %v110 = vadd.f32 %v48, %v109
  %111 = vmatmul.f32.gmra.mxu0 %v29
  %v112 = vpop.f32.mrf.mxu0
  %v113 = vadd.f32 %v48, %v112
  %114 = vdwg.mxu0
  %115 = vst [vmem:[%s3] sm:$0xff] %v68
  %116 = vst [vmem:[%s3 + $0x8] sm:$0xff] %v71
  %117 = vst [vmem:[%s3 + $0x10] sm:$0xff] %v74
  %118 = vst [vmem:[%s3 + $0x18] sm:$0xff] %v77
  %119 = vst [vmem:[%s3 + $0x20] sm:$0xff] %v80
  %120 = vst [vmem:[%s3 + $0x28] sm:$0xff] %v83
  %121 = vst [vmem:[%s3 + $0x30] sm:$0xff] %v86
  %122 = vst [vmem:[%s3 + $0x38] sm:$0xff] %v89
  %123 = vst [vmem:[%s3 + $0x40] sm:$0xff] %v92
  %124 = vst [vmem:[%s3 + $0x48] sm:$0xff] %v95
  %125 = vst [vmem:[%s3 + $0x50] sm:$0xff] %v98
  %126 = vst [vmem:[%s3 + $0x58] sm:$0xff] %v101
  %127 = vst [vmem:[%s3 + $0x60] sm:$0xff] %v104
  %128 = vst [vmem:[%s3 + $0x68] sm:$0xff] %v107
  %129 = vst [vmem:[%s3 + $0x70] sm:$0xff] %v110
  %130 = vst [vmem:[%s3 + $0x78] sm:$0xff] %v113
  // Predicated region
  $region14: #{graph_convolution.3} parent=0 // pred_check
    _
  $region15: #{graph_convolution.3} parent=0 // pred_check_branch
    %132 = sbr.rel (0) target = $region17
  $region16: #{graph_convolution.3} parent=0 // pred_region
    _
  $region17: #{graph_convolution.3} parent=0 // pred_fallthru
    _
  // Predicated region
  $region18: #{graph_convolution.3} parent=0 // pred_check
    _
  $region19: #{graph_convolution.3} parent=0 // pred_check_branch
    %134 = sbr.rel (0) target = $region21
  $region20: #{graph_convolution.3} parent=0 // pred_region
    _
  $region21: #{graph_convolution.3} parent=0 // pred_fallthru
    _

// kernel: graph_convolution.2
$region0: #{graph_convolution.2}
  #allocation0 [shape = 'u32[]', space=smem, size = 0x4, offset = 0x4, fixed_abs, tag = 'smem constant byte address 0x4 - core index']
  #allocation1 [shape = 'u32[72,128]{1,0:T(1,128)}', space=vmem, size = 0x9000, scoped, tag = 'internal scratch']
  %s0 = inlined_call_operand.vmem [shape: f32[128,32], index: 0, kind: input, shape index: {}]
  %s1 = inlined_call_operand.vmem [shape: f32[32,128], index: 1, kind: input, shape index: {}]
  %s2 = inlined_call_operand.vmem [shape: f32[128,128], index: 2, kind: output, shape index: {}]
  %s3 = sld [smem:[#allocation0]]
  $region18: #{graph_convolution.2} parent=0
    _
  %s5 = ssub.s32 1, %s3
  %s6 = scalar_select 0, %s5, %s3
  // Predicated region
  $region2: #{graph_convolution.2} parent=0 // pred_check
    _
  $region3: #{graph_convolution.2} parent=0 // pred_check_branch
    %8 = sbr.rel (0) target = $region5
  $region4: #{graph_convolution.2} parent=0 // pred_region
    _
  $region5: #{graph_convolution.2} parent=0 // pred_fallthru
    _
  // Predicated region
  $region6: #{graph_convolution.2} parent=0 // pred_check
    _
  $region7: #{graph_convolution.2} parent=0 // pred_check_branch
    %10 = sbr.rel (0) target = $region9
  $region8: #{graph_convolution.2} parent=0 // pred_region
    _
  $region9: #{graph_convolution.2} parent=0 // pred_fallthru
    _
  %v11 = vld [vmem:[%s0] sm:$0xff]
  %v12 = vld [vmem:[%s0 + $0x8] sm:$0xff]
  %v13 = vld [vmem:[%s0 + $0x10] sm:$0xff]
  %v14 = vld [vmem:[%s0 + $0x18] sm:$0xff]
  %v15 = vld [vmem:[%s0 + $0x20] sm:$0xff]
  %v16 = vld [vmem:[%s0 + $0x28] sm:$0xff]
  %v17 = vld [vmem:[%s0 + $0x30] sm:$0xff]
  %v18 = vld [vmem:[%s0 + $0x38] sm:$0xff]
  %v19 = vld [vmem:[%s0 + $0x40] sm:$0xff]
  %v20 = vld [vmem:[%s0 + $0x48] sm:$0xff]
  %v21 = vld [vmem:[%s0 + $0x50] sm:$0xff]
  %v22 = vld [vmem:[%s0 + $0x58] sm:$0xff]
  %v23 = vld [vmem:[%s0 + $0x60] sm:$0xff]
  %v24 = vld [vmem:[%s0 + $0x68] sm:$0xff]
  %v25 = vld [vmem:[%s0 + $0x70] sm:$0xff]
  %v26 = vld [vmem:[%s0 + $0x78] sm:$0xff]
  %v27 = vld [vmem:[%s1] sm:$0xff]
  %v28 = vld [vmem:[%s1 + $0x8] sm:$0xff]
  %v29 = vld [vmem:[%s1 + $0x10] sm:$0xff]
  %v30 = vld [vmem:[%s1 + $0x18] sm:$0xff]
  %vm31 = vcmask 261120
  %v33 = vsel %vm31, %v11, 0
  %v36 = vsel %vm31, %v12, 0
  %v39 = vsel %vm31, %v13, 0
  %v42 = vsel %vm31, %v14, 0
  %v45 = vsel %vm31, %v15, 0
  %v48 = vsel %vm31, %v16, 0
  %v51 = vsel %vm31, %v17, 0
  %v54 = vsel %vm31, %v18, 0
  %v57 = vsel %vm31, %v19, 0
  %v60 = vsel %vm31, %v20, 0
  %v63 = vsel %vm31, %v21, 0
  %v66 = vsel %vm31, %v22, 0
  %v69 = vsel %vm31, %v23, 0
  %v72 = vsel %vm31, %v24, 0
  %v75 = vsel %vm31, %v25, 0
  %v78 = vsel %vm31, %v26, 0
  %80 = vmatpush.msra.mxu0 0.0
  %81 = vmatpush.msra.mxu0 0.0
  %82 = vmatpush.msra.mxu0 0.0
  %83 = vmatpush.msra.mxu0 0.0
  %84 = vmatpush.msra.mxu0 0.0
  %85 = vmatpush.msra.mxu0 0.0
  %86 = vmatpush.msra.mxu0 0.0
  %87 = vmatpush.msra.mxu0 0.0
  %88 = vmatpush.msra.mxu0 0.0
  %89 = vmatpush.msra.mxu0 0.0
  %90 = vmatpush.msra.mxu0 0.0
  %91 = vmatpush.msra.mxu0 0.0
  %92 = vmatpush.msra.mxu0 %v30
  %93 = vmatpush.msra.mxu0 %v29
  %94 = vmatpush.msra.mxu0 %v28
  %95 = vmatpush.msra.mxu0 %v27
  %96 = vmatmul.f32.gmra.mxu0 %v33
  %v97 = vpop.f32.mrf.mxu0
  %v98 = vadd.f32 0.0, %v97
  %99 = vmatmul.f32.gmra.mxu0 %v36
  %v100 = vpop.f32.mrf.mxu0
  %v101 = vadd.f32 0.0, %v100
  %102 = vmatmul.f32.gmra.mxu0 %v39
  %v103 = vpop.f32.mrf.mxu0
  %v104 = vadd.f32 0.0, %v103
  %105 = vmatmul.f32.gmra.mxu0 %v42
  %v106 = vpop.f32.mrf.mxu0
  %v107 = vadd.f32 0.0, %v106
  %108 = vmatmul.f32.gmra.mxu0 %v45
  %v109 = vpop.f32.mrf.mxu0
  %v110 = vadd.f32 0.0, %v109
  %111 = vmatmul.f32.gmra.mxu0 %v48
  %v112 = vpop.f32.mrf.mxu0
  %v113 = vadd.f32 0.0, %v112
  %114 = vmatmul.f32.gmra.mxu0 %v51
  %v115 = vpop.f32.mrf.mxu0
  %v116 = vadd.f32 0.0, %v115
  %117 = vmatmul.f32.gmra.mxu0 %v54
  %v118 = vpop.f32.mrf.mxu0
  %v119 = vadd.f32 0.0, %v118
  %120 = vmatmul.f32.gmra.mxu0 %v57
  %v121 = vpop.f32.mrf.mxu0
  %v122 = vadd.f32 0.0, %v121
  %123 = vmatmul.f32.gmra.mxu0 %v60
  %v124 = vpop.f32.mrf.mxu0
  %v125 = vadd.f32 0.0, %v124
  %126 = vmatmul.f32.gmra.mxu0 %v63
  %v127 = vpop.f32.mrf.mxu0
  %v128 = vadd.f32 0.0, %v127
  %129 = vmatmul.f32.gmra.mxu0 %v66
  %v130 = vpop.f32.mrf.mxu0
  %v131 = vadd.f32 0.0, %v130
  %132 = vmatmul.f32.gmra.mxu0 %v69
  %v133 = vpop.f32.mrf.mxu0
  %v134 = vadd.f32 0.0, %v133
  %135 = vmatmul.f32.gmra.mxu0 %v72
  %v136 = vpop.f32.mrf.mxu0
  %v137 = vadd.f32 0.0, %v136
  %138 = vmatmul.f32.gmra.mxu0 %v75
  %v139 = vpop.f32.mrf.mxu0
  %v140 = vadd.f32 0.0, %v139
  %141 = vmatmul.f32.gmra.mxu0 %v78
  %v142 = vpop.f32.mrf.mxu0
  %v143 = vadd.f32 0.0, %v142
  %144 = vdwg.mxu0
  %145 = vst [vmem:[%s2] sm:$0xff] %v98
  %146 = vst [vmem:[%s2 + $0x8] sm:$0xff] %v101
  %147 = vst [vmem:[%s2 + $0x10] sm:$0xff] %v104
  %148 = vst [vmem:[%s2 + $0x18] sm:$0xff] %v107
  %149 = vst [vmem:[%s2 + $0x20] sm:$0xff] %v110
  %150 = vst [vmem:[%s2 + $0x28] sm:$0xff] %v113
  %151 = vst [vmem:[%s2 + $0x30] sm:$0xff] %v116
  %152 = vst [vmem:[%s2 + $0x38] sm:$0xff] %v119
  %153 = vst [vmem:[%s2 + $0x40] sm:$0xff] %v122
  %154 = vst [vmem:[%s2 + $0x48] sm:$0xff] %v125
  %155 = vst [vmem:[%s2 + $0x50] sm:$0xff] %v128
  %156 = vst [vmem:[%s2 + $0x58] sm:$0xff] %v131
  %157 = vst [vmem:[%s2 + $0x60] sm:$0xff] %v134
  %158 = vst [vmem:[%s2 + $0x68] sm:$0xff] %v137
  %159 = vst [vmem:[%s2 + $0x70] sm:$0xff] %v140
  %160 = vst [vmem:[%s2 + $0x78] sm:$0xff] %v143
  // Predicated region
  $region10: #{graph_convolution.2} parent=0 // pred_check
    _
  $region11: #{graph_convolution.2} parent=0 // pred_check_branch
    %162 = sbr.rel (0) target = $region13
  $region12: #{graph_convolution.2} parent=0 // pred_region
    _
  $region13: #{graph_convolution.2} parent=0 // pred_fallthru
    _
  // Predicated region
  $region14: #{graph_convolution.2} parent=0 // pred_check
    _
  $region15: #{graph_convolution.2} parent=0 // pred_check_branch
    %164 = sbr.rel (0) target = $region17
  $region16: #{graph_convolution.2} parent=0 // pred_region
    _
  $region17: #{graph_convolution.2} parent=0 // pred_fallthru
    _

</llo_original>
